<compile_context>
chip_gen: v7x
topology: tpu7x:2x2x1
jax: 0.10.0
libtpu: 0.0.40
codegen_flags: <defaults>
</compile_context>

<pallas_src>
import functools

import numpy as np
import jax
import jax.numpy as jnp
from jax import lax
from jax.experimental import pallas as pl
from jax.experimental.pallas import tpu as pltpu

# ---- module hyper-parameters (small, synthetic) -----------------------------
DIM = 32            # channels ("dim" in the module)
KERNEL_SIZE = 3
DILATIONS = (1, 3)
BATCH = 2           # maps 1:1 onto v7x's two TensorCores
T = 128             # sequence length -> full 128-lane blocks, unmasked stores
NEG_SLOPE = 0.2     # LeakyReLU(0.2)


def _pad_for(kernel_size, dilation):
    # cc.get_padding(kernel_size, dilation, mode='centered') -> symmetric "same" pad
    return ((kernel_size - 1) * dilation) // 2


# ------------------------------ Pallas kernel --------------------------------
def _residual_layer_kernel(x_ref, w_ref, b_ref, o_ref, *,
                           dilations, kernel_size, mxu_dtype):
    # x_ref/o_ref : (C, T)           one batch element; channels on sublanes,
    #                                time on lanes (batch dim squeezed by BlockSpec)
    # w_ref       : (L, K, C, C)     weight-normalized conv weights, per-tap slices
    # b_ref       : (L, C, 1)        biases
    C, Tn = x_ref.shape

    x = x_ref[...].astype(jnp.float32)                        # (C, T)
    # Hoisted lane/time index, shared by every (layer, tap) mask.
    t_idx = lax.broadcasted_iota(jnp.int32, (C, Tn), 1)

    y = x
    for l, d in enumerate(dilations):
        pad = _pad_for(kernel_size, d)
        # LeakyReLU(0.2) -- keep elementwise work in f32 (v5e has no bf16 VALU).
        a = jnp.where(y > 0, y, NEG_SLOPE * y)                 # (C, T)

        acc = None
        for k in range(kernel_size):
            off = k * d - pad                                  # static time offset
            if off == 0:
                tap = a
            else:
                # tap[:, t] = a[:, t + off] if 0 <= t + off < T else 0 (zero padding)
                shifted = pltpu.roll(a, shift=(-off) % Tn, axis=1)   # XLU, off-VALU
                valid = jnp.logical_and(t_idx + off >= 0, t_idx + off < Tn)
                tap = jnp.where(valid, shifted, 0.0)
            # One (C, C) @ (C, T) MXU dot per tap; f32 accumulation regardless
            # of operand dtype. Tap order k matches the (L, K, Cout, Cin) layout
            # produced by effective_weights() -- keep these in sync.
            part = jnp.dot(w_ref[l, k].astype(mxu_dtype),
                           tap.astype(mxu_dtype),
                           preferred_element_type=jnp.float32)       # (C, T) f32
            acc = part if acc is None else acc + part
        y = acc + b_ref[l]                                     # bias (C,1) broadcast over lanes

    # residual connection, lane-dense (128-wide) store
    o_ref[...] = (y + x).astype(o_ref.dtype)


# ------------------------------ JAX glue --------------------------------------
def make_params(key, dim, kernel_size, dilations):
    """Deterministic synthetic weight_norm(Conv1d) params per dilation."""
    L = len(dilations)
    kv, kg, kb = jax.random.split(key, 3)
    v = 0.1 * jax.random.normal(kv, (L, dim, dim, kernel_size), jnp.float32)  # (L, Cout, Cin, K)
    g = 1.0 + 0.1 * jax.random.normal(kg, (L, dim), jnp.float32)              # (L, Cout)
    b = 0.1 * jax.random.normal(kb, (L, dim), jnp.float32)                    # (L, Cout)
    return v, g, b


def effective_weights(v, g):
    """weight_norm (w = g * v / ||v||, norm over (Cin, K)), laid out per tap.

    Returns (L, K, C_out, C_in) so the kernel can run one accumulating MXU dot
    per tap: w[l, k] @ shifted_activation_k. The k axis here MUST match the
    tap order (k = 0..K-1, offset k*d - pad) inside the kernel.
    """
    norm = jnp.sqrt(jnp.sum(v * v, axis=(2, 3), keepdims=True))
    w = v * (g[:, :, None, None] / norm)                  # (L, Cout, Cin, K)
    return jnp.transpose(w, (0, 3, 1, 2))                 # (L, K, Cout, Cin)


def residual_layer(x_nct, v, g, b, *, kernel_size, dilations, use_bf16_mxu=False):
    """x_nct: (B, C, T) like PyTorch; returns (B, C, T)."""
    B, C, Tn = x_nct.shape
    L = len(dilations)

    w = effective_weights(v, g)                           # (L, K, Cout, Cin)
    bias = b[:, :, None]                                  # (L, C, 1)

    kernel = functools.partial(
        _residual_layer_kernel,
        dilations=tuple(dilations),
        kernel_size=kernel_size,
        mxu_dtype=jnp.bfloat16 if use_bf16_mxu else jnp.float32)

    vmem = pltpu.MemorySpace.VMEM
    out = pl.pallas_call(
        kernel,
        out_shape=jax.ShapeDtypeStruct((B, C, Tn), x_nct.dtype),
        grid=(B,),
        in_specs=[
            # x: one batch element per grid step, batch dim squeezed out.
            pl.BlockSpec((None, C, Tn), lambda bi: (bi, 0, 0), memory_space=vmem),
            # weights / bias: full arrays, resident in VMEM for every step.
            pl.BlockSpec((L, kernel_size, C, C), lambda bi: (0, 0, 0, 0),
                         memory_space=vmem),
            pl.BlockSpec((L, C, 1), lambda bi: (0, 0, 0), memory_space=vmem),
        ],
        out_specs=pl.BlockSpec((None, C, Tn), lambda bi: (bi, 0, 0),
                               memory_space=vmem),
        compiler_params=pltpu.CompilerParams(
            dimension_semantics=("parallel",)),          # both TCs on v7x
        input_output_aliases={0: 0},                      # reuse x's HBM buffer
    )(x_nct, w, bias)
    return out


def reference(x_nct, v, g, b, kernel_size, dilations):
    """Pure-JAX reference matching PyTorch ResidualLayer.forward."""
    norm = jnp.sqrt(jnp.sum(v * v, axis=(2, 3), keepdims=True))
    w = v * (g[:, :, None, None] / norm)                  # (L, Cout, Cin, K) = OIH
    y = x_nct
    for l, d in enumerate(dilations):
        a = jnp.where(y > 0, y, NEG_SLOPE * y)
        pad = _pad_for(kernel_size, d)
        y = jax.lax.conv_general_dilated(
            a, w[l], window_strides=(1,), padding=[(pad, pad)],
            rhs_dilation=(d,),
            dimension_numbers=("NCH", "OIH", "NCH")) + b[l][None, :, None]
    return y + x_nct


if __name__ == "__main__":
    key = jax.random.PRNGKey(0)
    kx, kp = jax.random.split(key)
    x = jax.random.normal(kx, (BATCH, DIM, T), jnp.float32)   # PyTorch (N, C, T)
    v, g, b = make_params(kp, DIM, KERNEL_SIZE, DILATIONS)

    ref = reference(x, v, g, b, KERNEL_SIZE, DILATIONS)

    # f32 MXU path: exact match with the reference.
    out = residual_layer(x, v, g, b, kernel_size=KERNEL_SIZE, dilations=DILATIONS,
                         use_bf16_mxu=False)
    out = jax.block_until_ready(out)
    assert out.shape == x.shape
    np.testing.assert_allclose(np.asarray(out), np.asarray(ref), atol=1e-4, rtol=1e-4)

    # bf16-at-the-MXU path (v6e/v7x perf mode): f32 accumulation, loose tolerance.
    out_bf16 = residual_layer(x, v, g, b, kernel_size=KERNEL_SIZE,
                              dilations=DILATIONS, use_bf16_mxu=True)
    out_bf16 = jax.block_until_ready(out_bf16)
    np.testing.assert_allclose(np.asarray(out_bf16), np.asarray(ref),
                               atol=5e-2, rtol=5e-2)

    print("KERNEL_OK")
</pallas_src>

<mosaic_0001>
module attributes {stable_mosaic.version = 11 : i64} {
  func.func @_residual_layer_kernel(%arg0: i32, %arg1: memref<1x32x128xf32, #tpu.memory_space<vmem>>, %arg2: memref<2x3x32x32xf32, #tpu.memory_space<vmem>>, %arg3: memref<2x32x1xf32, #tpu.memory_space<vmem>>, %arg4: memref<1x32x128xf32, #tpu.memory_space<vmem>>) attributes {dimension_semantics = [#tpu.dimension_semantics<parallel>], iteration_bounds = array<i64: 2>, scalar_prefetch = 0 : i64, scratch_operands = 0 : i64, tpu.core_type = #tpu.core_type<tc>, window_params = [{transform_indices = @transform_0, window_bounds = array<i64: 1, 32, 128>}, {pipeline_mode = #tpu.pipeline_mode<synchronous>, transform_indices = @transform_1, window_bounds = array<i64: 2, 3, 32, 32>}, {pipeline_mode = #tpu.pipeline_mode<synchronous>, transform_indices = @transform_2, window_bounds = array<i64: 2, 32, 1>}, {transform_indices = @transform_3, window_bounds = array<i64: 1, 32, 128>}]} {
    %c0 = arith.constant 0 : index
    %c0_0 = arith.constant 0 : index
    %c0_1 = arith.constant 0 : index
    %0 = vector.load %arg1[%c0, %c0_0, %c0_1] : memref<1x32x128xf32, #tpu.memory_space<vmem>>, vector<1x32x128xf32>
    %1 = vector.shape_cast %0 : vector<1x32x128xf32> to vector<32x128xf32>
    %2 = tpu.iota {dimensions = array<i32: 1>} : vector<32x128xi32>
    %cst = arith.constant 0.000000e+00 : f32
    %3 = vector.broadcast %cst : f32 to vector<32x128xf32>
    %4 = arith.cmpf ogt, %1, %3 : vector<32x128xf32>
    %cst_2 = arith.constant 2.000000e-01 : f32
    %5 = vector.broadcast %cst_2 : f32 to vector<32x128xf32>
    %6 = arith.mulf %5, %1 : vector<32x128xf32>
    %7 = arith.select %4, %1, %6 : vector<32x128xi1>, vector<32x128xf32>
    %c1_i32 = arith.constant 1 : i32
    %8 = tpu.dynamic_rotate %7 by %c1_i32 dim 1 : vector<32x128xf32>, i32 -> vector<32x128xf32>
    %c-1_i32 = arith.constant -1 : i32
    %9 = vector.broadcast %c-1_i32 : i32 to vector<32x128xi32>
    %10 = arith.addi %2, %9 : vector<32x128xi32>
    %c0_i32 = arith.constant 0 : i32
    %11 = vector.broadcast %c0_i32 : i32 to vector<32x128xi32>
    %12 = arith.cmpi sge, %10, %11 : vector<32x128xi32>
    %c-1_i32_3 = arith.constant -1 : i32
    %13 = vector.broadcast %c-1_i32_3 : i32 to vector<32x128xi32>
    %14 = arith.addi %2, %13 : vector<32x128xi32>
    %c128_i32 = arith.constant 128 : i32
    %15 = vector.broadcast %c128_i32 : i32 to vector<32x128xi32>
    %16 = arith.cmpi slt, %14, %15 : vector<32x128xi32>
    %17 = arith.andi %12, %16 : vector<32x128xi1>
    %cst_4 = arith.constant 0.000000e+00 : f32
    %18 = vector.broadcast %cst_4 : f32 to vector<32x128xf32>
    %19 = arith.select %17, %8, %18 : vector<32x128xi1>, vector<32x128xf32>
    %c0_5 = arith.constant 0 : index
    %c0_6 = arith.constant 0 : index
    %c0_7 = arith.constant 0 : index
    %c0_8 = arith.constant 0 : index
    %20 = vector.load %arg2[%c0_5, %c0_6, %c0_7, %c0_8] : memref<2x3x32x32xf32, #tpu.memory_space<vmem>>, vector<1x1x32x32xf32>
    %21 = vector.shape_cast %20 : vector<1x1x32x32xf32> to vector<32x32xf32>
    %cst_9 = arith.constant dense<0.000000e+00> : vector<32x128xf32>
    %22 = tpu.matmul %21, %19, %cst_9 {dimension_numbers = #tpu.dot_dimension_numbers<[1], [0], [0], [1], [0, 0, 1, 1], [], []>} : vector<32x32xf32>, vector<32x128xf32>, vector<32x128xf32> -> vector<32x128xf32>
    %c0_10 = arith.constant 0 : index
    %c1 = arith.constant 1 : index
    %c0_11 = arith.constant 0 : index
    %c0_12 = arith.constant 0 : index
    %23 = vector.load %arg2[%c0_10, %c1, %c0_11, %c0_12] : memref<2x3x32x32xf32, #tpu.memory_space<vmem>>, vector<1x1x32x32xf32>
    %24 = vector.shape_cast %23 : vector<1x1x32x32xf32> to vector<32x32xf32>
    %cst_13 = arith.constant dense<0.000000e+00> : vector<32x128xf32>
    %25 = tpu.matmul %24, %7, %cst_13 {dimension_numbers = #tpu.dot_dimension_numbers<[1], [0], [0], [1], [0, 0, 1, 1], [], []>} : vector<32x32xf32>, vector<32x128xf32>, vector<32x128xf32> -> vector<32x128xf32>
    %26 = arith.addf %22, %25 : vector<32x128xf32>
    %c127_i32 = arith.constant 127 : i32
    %27 = tpu.dynamic_rotate %7 by %c127_i32 dim 1 : vector<32x128xf32>, i32 -> vector<32x128xf32>
    %c1_i32_14 = arith.constant 1 : i32
    %28 = vector.broadcast %c1_i32_14 : i32 to vector<32x128xi32>
    %29 = arith.addi %2, %28 : vector<32x128xi32>
    %c0_i32_15 = arith.constant 0 : i32
    %30 = vector.broadcast %c0_i32_15 : i32 to vector<32x128xi32>
    %31 = arith.cmpi sge, %29, %30 : vector<32x128xi32>
    %c1_i32_16 = arith.constant 1 : i32
    %32 = vector.broadcast %c1_i32_16 : i32 to vector<32x128xi32>
    %33 = arith.addi %2, %32 : vector<32x128xi32>
    %c128_i32_17 = arith.constant 128 : i32
    %34 = vector.broadcast %c128_i32_17 : i32 to vector<32x128xi32>
    %35 = arith.cmpi slt, %33, %34 : vector<32x128xi32>
    %36 = arith.andi %31, %35 : vector<32x128xi1>
    %cst_18 = arith.constant 0.000000e+00 : f32
    %37 = vector.broadcast %cst_18 : f32 to vector<32x128xf32>
    %38 = arith.select %36, %27, %37 : vector<32x128xi1>, vector<32x128xf32>
    %c0_19 = arith.constant 0 : index
    %c2 = arith.constant 2 : index
    %c0_20 = arith.constant 0 : index
    %c0_21 = arith.constant 0 : index
    %39 = vector.load %arg2[%c0_19, %c2, %c0_20, %c0_21] : memref<2x3x32x32xf32, #tpu.memory_space<vmem>>, vector<1x1x32x32xf32>
    %40 = vector.shape_cast %39 : vector<1x1x32x32xf32> to vector<32x32xf32>
    %cst_22 = arith.constant dense<0.000000e+00> : vector<32x128xf32>
    %41 = tpu.matmul %40, %38, %cst_22 {dimension_numbers = #tpu.dot_dimension_numbers<[1], [0], [0], [1], [0, 0, 1, 1], [], []>} : vector<32x32xf32>, vector<32x128xf32>, vector<32x128xf32> -> vector<32x128xf32>
    %42 = arith.addf %26, %41 : vector<32x128xf32>
    %c0_23 = arith.constant 0 : index
    %c0_24 = arith.constant 0 : index
    %c0_25 = arith.constant 0 : index
    %43 = vector.load %arg3[%c0_23, %c0_24, %c0_25] : memref<2x32x1xf32, #tpu.memory_space<vmem>>, vector<1x32x1xf32>
    %44 = vector.shape_cast %43 : vector<1x32x1xf32> to vector<32x1xf32>
    %45 = vector.broadcast %44 : vector<32x1xf32> to vector<32x128xf32>
    %46 = arith.addf %42, %45 : vector<32x128xf32>
    %cst_26 = arith.constant 0.000000e+00 : f32
    %47 = vector.broadcast %cst_26 : f32 to vector<32x128xf32>
    %48 = arith.cmpf ogt, %46, %47 : vector<32x128xf32>
    %cst_27 = arith.constant 2.000000e-01 : f32
    %49 = vector.broadcast %cst_27 : f32 to vector<32x128xf32>
    %50 = arith.mulf %49, %46 : vector<32x128xf32>
    %51 = arith.select %48, %46, %50 : vector<32x128xi1>, vector<32x128xf32>
    %c3_i32 = arith.constant 3 : i32
    %52 = tpu.dynamic_rotate %51 by %c3_i32 dim 1 : vector<32x128xf32>, i32 -> vector<32x128xf32>
    %c-3_i32 = arith.constant -3 : i32
    %53 = vector.broadcast %c-3_i32 : i32 to vector<32x128xi32>
    %54 = arith.addi %2, %53 : vector<32x128xi32>
    %c0_i32_28 = arith.constant 0 : i32
    %55 = vector.broadcast %c0_i32_28 : i32 to vector<32x128xi32>
    %56 = arith.cmpi sge, %54, %55 : vector<32x128xi32>
    %c-3_i32_29 = arith.constant -3 : i32
    %57 = vector.broadcast %c-3_i32_29 : i32 to vector<32x128xi32>
    %58 = arith.addi %2, %57 : vector<32x128xi32>
    %c128_i32_30 = arith.constant 128 : i32
    %59 = vector.broadcast %c128_i32_30 : i32 to vector<32x128xi32>
    %60 = arith.cmpi slt, %58, %59 : vector<32x128xi32>
    %61 = arith.andi %56, %60 : vector<32x128xi1>
    %cst_31 = arith.constant 0.000000e+00 : f32
    %62 = vector.broadcast %cst_31 : f32 to vector<32x128xf32>
    %63 = arith.select %61, %52, %62 : vector<32x128xi1>, vector<32x128xf32>
    %c1_32 = arith.constant 1 : index
    %c0_33 = arith.constant 0 : index
    %c0_34 = arith.constant 0 : index
    %c0_35 = arith.constant 0 : index
    %64 = vector.load %arg2[%c1_32, %c0_33, %c0_34, %c0_35] : memref<2x3x32x32xf32, #tpu.memory_space<vmem>>, vector<1x1x32x32xf32>
    %65 = vector.shape_cast %64 : vector<1x1x32x32xf32> to vector<32x32xf32>
    %cst_36 = arith.constant dense<0.000000e+00> : vector<32x128xf32>
    %66 = tpu.matmul %65, %63, %cst_36 {dimension_numbers = #tpu.dot_dimension_numbers<[1], [0], [0], [1], [0, 0, 1, 1], [], []>} : vector<32x32xf32>, vector<32x128xf32>, vector<32x128xf32> -> vector<32x128xf32>
    %c1_37 = arith.constant 1 : index
    %c1_38 = arith.constant 1 : index
    %c0_39 = arith.constant 0 : index
    %c0_40 = arith.constant 0 : index
    %67 = vector.load %arg2[%c1_37, %c1_38, %c0_39, %c0_40] : memref<2x3x32x32xf32, #tpu.memory_space<vmem>>, vector<1x1x32x32xf32>
    %68 = vector.shape_cast %67 : vector<1x1x32x32xf32> to vector<32x32xf32>
    %cst_41 = arith.constant dense<0.000000e+00> : vector<32x128xf32>
    %69 = tpu.matmul %68, %51, %cst_41 {dimension_numbers = #tpu.dot_dimension_numbers<[1], [0], [0], [1], [0, 0, 1, 1], [], []>} : vector<32x32xf32>, vector<32x128xf32>, vector<32x128xf32> -> vector<32x128xf32>
    %70 = arith.addf %66, %69 : vector<32x128xf32>
    %c125_i32 = arith.constant 125 : i32
    %71 = tpu.dynamic_rotate %51 by %c125_i32 dim 1 : vector<32x128xf32>, i32 -> vector<32x128xf32>
    %c3_i32_42 = arith.constant 3 : i32
    %72 = vector.broadcast %c3_i32_42 : i32 to vector<32x128xi32>
    %73 = arith.addi %2, %72 : vector<32x128xi32>
    %c0_i32_43 = arith.constant 0 : i32
    %74 = vector.broadcast %c0_i32_43 : i32 to vector<32x128xi32>
    %75 = arith.cmpi sge, %73, %74 : vector<32x128xi32>
    %c3_i32_44 = arith.constant 3 : i32
    %76 = vector.broadcast %c3_i32_44 : i32 to vector<32x128xi32>
    %77 = arith.addi %2, %76 : vector<32x128xi32>
    %c128_i32_45 = arith.constant 128 : i32
    %78 = vector.broadcast %c128_i32_45 : i32 to vector<32x128xi32>
    %79 = arith.cmpi slt, %77, %78 : vector<32x128xi32>
    %80 = arith.andi %75, %79 : vector<32x128xi1>
    %cst_46 = arith.constant 0.000000e+00 : f32
    %81 = vector.broadcast %cst_46 : f32 to vector<32x128xf32>
    %82 = arith.select %80, %71, %81 : vector<32x128xi1>, vector<32x128xf32>
    %c1_47 = arith.constant 1 : index
    %c2_48 = arith.constant 2 : index
    %c0_49 = arith.constant 0 : index
    %c0_50 = arith.constant 0 : index
    %83 = vector.load %arg2[%c1_47, %c2_48, %c0_49, %c0_50] : memref<2x3x32x32xf32, #tpu.memory_space<vmem>>, vector<1x1x32x32xf32>
    %84 = vector.shape_cast %83 : vector<1x1x32x32xf32> to vector<32x32xf32>
    %cst_51 = arith.constant dense<0.000000e+00> : vector<32x128xf32>
    %85 = tpu.matmul %84, %82, %cst_51 {dimension_numbers = #tpu.dot_dimension_numbers<[1], [0], [0], [1], [0, 0, 1, 1], [], []>} : vector<32x32xf32>, vector<32x128xf32>, vector<32x128xf32> -> vector<32x128xf32>
    %86 = arith.addf %70, %85 : vector<32x128xf32>
    %c1_52 = arith.constant 1 : index
    %c0_53 = arith.constant 0 : index
    %c0_54 = arith.constant 0 : index
    %87 = vector.load %arg3[%c1_52, %c0_53, %c0_54] : memref<2x32x1xf32, #tpu.memory_space<vmem>>, vector<1x32x1xf32>
    %88 = vector.shape_cast %87 : vector<1x32x1xf32> to vector<32x1xf32>
    %89 = vector.broadcast %88 : vector<32x1xf32> to vector<32x128xf32>
    %90 = arith.addf %86, %89 : vector<32x128xf32>
    %91 = arith.addf %90, %1 : vector<32x128xf32>
    %c0_55 = arith.constant 0 : index
    %c0_56 = arith.constant 0 : index
    %c0_57 = arith.constant 0 : index
    %92 = vector.load %arg4[%c0_55, %c0_56, %c0_57] : memref<1x32x128xf32, #tpu.memory_space<vmem>>, vector<1x32x128xf32>
    %93 = vector.shape_cast %92 : vector<1x32x128xf32> to vector<32x128xf32>
    %94 = vector.shape_cast %91 : vector<32x128xf32> to vector<1x32x128xf32>
    tpu.vector_store %arg4[%c0_55, %c0_56, %c0_57], %94 {strides = array<i32>} : memref<1x32x128xf32, #tpu.memory_space<vmem>>, vector<1x32x128xf32>,
    return
  }
  func.func @transform_0(%arg0: i32) -> (i32, i32, i32) {
    %c0_i32 = arith.constant 0 : i32
    %c0_i32_0 = arith.constant 0 : i32
    %c0_i32_1 = arith.constant 0 : i32
    return %arg0, %c0_i32, %c0_i32_0 : i32, i32, i32
  }
  func.func @transform_1(%arg0: i32) -> (i32, i32, i32, i32) {
    %c0_i32 = arith.constant 0 : i32
    %c0_i32_0 = arith.constant 0 : i32
    %c0_i32_1 = arith.constant 0 : i32
    %c0_i32_2 = arith.constant 0 : i32
    %c0_i32_3 = arith.constant 0 : i32
    return %c0_i32, %c0_i32_0, %c0_i32_1, %c0_i32_2 : i32, i32, i32, i32
  }
  func.func @transform_2(%arg0: i32) -> (i32, i32, i32) {
    %c0_i32 = arith.constant 0 : i32
    %c0_i32_0 = arith.constant 0 : i32
    %c0_i32_1 = arith.constant 0 : i32
    %c0_i32_2 = arith.constant 0 : i32
    return %c0_i32, %c0_i32_0, %c0_i32_1 : i32, i32, i32
  }
  func.func @transform_3(%arg0: i32) -> (i32, i32, i32) {
    %c0_i32 = arith.constant 0 : i32
    %c0_i32_0 = arith.constant 0 : i32
    %c0_i32_1 = arith.constant 0 : i32
    return %arg0, %c0_i32, %c0_i32_0 : i32, i32, i32
  }
}

</mosaic_0001>

<llo_original>
// kernel: tpu_custom_call.1
$region0: #{tpu_custom_call.1}
  #allocation0 [shape = 'u32[]', space=smem, size = 0x4, offset = 0x4, fixed_abs, tag = 'smem constant byte address 0x4 - core index']
  #allocation1 [shape = 'u32[144,128]{1,0:T(1,128)}', space=vmem, size = 0x12000, scoped, tag = 'internal scratch']
  %s0 = inlined_call_operand.hbm [shape: f32[2,32,128], index: 0, kind: input, shape index: {}, may-alias: {0,3}]
  %s1 = inlined_call_operand.vmem [shape: f32[2,3,32,32], index: 1, kind: input, shape index: {}]
  %s2 = inlined_call_operand.vmem [shape: f32[2,32,1], index: 2, kind: input, shape index: {}]
  %s3 = inlined_call_operand.hbm [shape: f32[2,32,128], index: 3, kind: output, shape index: {}, may-alias: {0,3}]
  %s4 = sld [smem:[#allocation0]]
  $region49: #{tpu_custom_call.1} parent=0
    _
  %s6 = ssub.s32 1, %s4
  %s7 = scalar_select 0, %s6, %s4
  $region1: #{tpu_custom_call.1} parent=0
    #allocation2 [shape = 'u8[32768]{0}', space=vmem, size = 0x8000, scoped, tag = 'input window, operand 0']
    #allocation3 [shape = 's32[2]{0}', space=sflag, size = 0x8, scoped, tag = 'scoped memory for tpu_custom_call.1']
    #allocation4 [shape = 's32[2]{0}', space=sflag, size = 0x8, scoped, tag = 'scoped memory for tpu_custom_call.1']
    #allocation5 [shape = 'u8[32768]{0}', space=vmem, size = 0x8000, scoped, tag = 'output window, operand 0']
    %8 = vsyncpa [#allocation3], 0
    %s9 = scalar_lea.sflag [#allocation3], 1
    %10 = vsyncpa %s9, 0
    %11 = vsyncpa [#allocation4], 0
    %s12 = scalar_lea.sflag [#allocation4], 1
    %13 = vsyncpa %s12, 0
    loop: start=0, step=1, limit=4
    $region2: #{tpu_custom_call.1} parent=1 // loop_pre_header
      _
    $region3: #{tpu_custom_call.1} parent=1 // loop_header
      %s15 = sphi 0, %s19
      %p16 = scmp.ge.s32.totalorder %s15, 4
      %s25 = sphi 0, %s27
      %s28 = sphi 0, %s25
      %s29 = sphi 0, %s28
      %s45 = sphi 0, %s29
      %s49 = sphi 0, %s49
      %s51 = sphi 0, %s49
      %s52 = sphi 0, %s51
      %s66 = sphi 0, %s52
      %s70 = sphi 0, %s70
      %s72 = sphi 0, %s70
      %s73 = sphi 0, %s72
      %s87 = sphi 0, %s73
      %s93 = sphi 0, %s95
      %s96 = sphi 0, %s93
      %s97 = sphi 0, %s96
      %s113 = sphi 0, %s97
    $region4: #{tpu_custom_call.1} parent=1 // loop_header_branch
      %18 = sbr.rel (%p16) target = $region8
    $region5: #{tpu_custom_call.1} parent=1 // loop_body
      %s20 = ssub.s32 %s15, 1
      %s21 = ssub.s32 %s15, 2
      %s22 = sadd.s32 %s15, 1
      %s23 = ssub.s32 %s15, %s22
      %p24 = scmp.eq.s32.totalorder %s23, 0
      %s26 = sadd.s32 %s25, 1
      %s27 = scalar_select %p24, %s25, %s26
      %p30 = pneg %p24
      %p31 = scmp.eq.s32.totalorder %s15, 1
      %p32 = por %p30, %p31
      %p33 = scmp.ne.s32.totalorder %s25, %s28
      %p34 = scmp.eq.s32.totalorder %s15, 0
      %p35 = por %p33, %p34
      %p36 = scmp.ne.s32.totalorder %s25, %s28
      %p37 = scmp.eq.s32.totalorder %s20, 1
      %p38 = por %p36, %p37
      %p39 = scmp.ne.s32.totalorder %s28, %s29
      %p40 = scmp.eq.s32.totalorder %s20, 0
      %p41 = por %p39, %p40
      %p42 = scmp.ne.s32.totalorder %s28, %s29
      %p43 = scmp.eq.s32.totalorder %s21, 1
      %p44 = por %p42, %p43
      %p46 = scmp.ne.s32.totalorder %s29, %s45
      %p47 = scmp.eq.s32.totalorder %s21, 0
      %p48 = por %p46, %p47
      %s50 = sadd.s32 %s49, 1
      %p53 = scmp.eq.s32.totalorder %s15, 1
      %p54 = scmp.ne.s32.totalorder %s49, %s51
      %p55 = scmp.eq.s32.totalorder %s15, 0
      %p56 = por %p54, %p55
      %p57 = scmp.ne.s32.totalorder %s49, %s51
      %p58 = scmp.eq.s32.totalorder %s20, 1
      %p59 = por %p57, %p58
      %p60 = scmp.ne.s32.totalorder %s51, %s52
      %p61 = scmp.eq.s32.totalorder %s20, 0
      %p62 = por %p60, %p61
      %p63 = scmp.ne.s32.totalorder %s51, %s52
      %p64 = scmp.eq.s32.totalorder %s21, 1
      %p65 = por %p63, %p64
      %p67 = scmp.ne.s32.totalorder %s52, %s66
      %p68 = scmp.eq.s32.totalorder %s21, 0
      %p69 = por %p67, %p68
      %s71 = sadd.s32 %s70, 1
      %p74 = scmp.eq.s32.totalorder %s15, 1
      %p75 = scmp.ne.s32.totalorder %s70, %s72
      %p76 = scmp.eq.s32.totalorder %s15, 0
      %p77 = por %p75, %p76
      %p78 = scmp.ne.s32.totalorder %s70, %s72
      %p79 = scmp.eq.s32.totalorder %s20, 1
      %p80 = por %p78, %p79
      %p81 = scmp.ne.s32.totalorder %s72, %s73
      %p82 = scmp.eq.s32.totalorder %s20, 0
      %p83 = por %p81, %p82
      %p84 = scmp.ne.s32.totalorder %s72, %s73
      %p85 = scmp.eq.s32.totalorder %s21, 1
      %p86 = por %p84, %p85
      %p88 = scmp.ne.s32.totalorder %s73, %s87
      %p89 = scmp.eq.s32.totalorder %s21, 0
      %p90 = por %p88, %p89
      %s91 = ssub.s32 %s15, %s22
      %p92 = scmp.eq.s32.totalorder %s91, 0
      %s94 = sadd.s32 %s93, 1
      %s95 = scalar_select %p92, %s93, %s94
      %p98 = pneg %p92
      %p99 = scmp.eq.s32.totalorder %s15, 1
      %p100 = por %p98, %p99
      %p101 = scmp.ne.s32.totalorder %s93, %s96
      %p102 = scmp.eq.s32.totalorder %s15, 0
      %p103 = por %p101, %p102
      %p104 = scmp.ne.s32.totalorder %s93, %s96
      %p105 = scmp.eq.s32.totalorder %s20, 1
      %p106 = por %p104, %p105
      %p107 = scmp.ne.s32.totalorder %s96, %s97
      %p108 = scmp.eq.s32.totalorder %s20, 0
      %p109 = por %p107, %p108
      %p110 = scmp.ne.s32.totalorder %s96, %s97
      %p111 = scmp.eq.s32.totalorder %s21, 1
      %p112 = por %p110, %p111
      %p114 = scmp.ne.s32.totalorder %s97, %s113
      %p115 = scmp.eq.s32.totalorder %s21, 0
      %p116 = por %p114, %p115
      %p117 = scmp.le.s32.totalorder 1, %s15
      %p118 = scmp.lt.s32.totalorder %s15, 3
      %p119 = pnand %p117, %p118
      %p120 = pneg %p119
      // Predicated region
      $region9: #{tpu_custom_call.1} parent=5 // pred_check
        _
      $region10: #{tpu_custom_call.1} parent=5 // pred_check_branch
        %122 = sbr.rel (%p119) target = $region12
      $region11: #{tpu_custom_call.1} parent=5 // pred_region
        %s123 = ssub.s32 %s15, 1
        // Predicated region
        $region13: #{tpu_custom_call.1} parent=11 // pred_check
          %p124 = pneg %p62
        $region14: #{tpu_custom_call.1} parent=11 // pred_check_branch
          %126 = sbr.rel (%p124) target = $region16
        $region15: #{tpu_custom_call.1} parent=11 // pred_region
          _
        $region16: #{tpu_custom_call.1} parent=11 // pred_fallthru
          _
        // Predicated region
        $region17: #{tpu_custom_call.1} parent=11 // pred_check
          %p127 = pneg %p83
        $region18: #{tpu_custom_call.1} parent=11 // pred_check_branch
          %129 = sbr.rel (%p127) target = $region20
        $region19: #{tpu_custom_call.1} parent=11 // pred_region
          _
        $region20: #{tpu_custom_call.1} parent=11 // pred_fallthru
          _
      $region12: #{tpu_custom_call.1} parent=5 // pred_fallthru
        _
      %p130 = scmp.lt.s32.totalorder %s15, 2
      // Predicated region
      $region21: #{tpu_custom_call.1} parent=5 // pred_check
        %p131 = pneg %p130
      $region22: #{tpu_custom_call.1} parent=5 // pred_check_branch
        %133 = sbr.rel (%p131) target = $region24
      $region23: #{tpu_custom_call.1} parent=5 // pred_region
        // Predicated region
        $region25: #{tpu_custom_call.1} parent=23 // pred_check
          %p134 = pneg %p35
        $region26: #{tpu_custom_call.1} parent=23 // pred_check_branch
          %136 = sbr.rel (%p134) target = $region28
        $region27: #{tpu_custom_call.1} parent=23 // pred_region
          %s137 = sand.u32 %s25, 1
          %s138 = scalar_lea.sflag [#allocation3], %s137
          %s139 = sand.u32 %s25, 1
          %s140 = smul.addr %s139, 32
          %s141 = scalar_lea.vmem [#allocation2], %s140
          %s143 = ssub.s32 512, 512
          %144 = vsyncadd %s138, %s143
          %s145 = smul.addr %s15, 4
          %s146 = smul.addr %s145, 128
          %s147 = scalar_lea.hbm %s0, %s146
          %s148 = sshll.u32 %s141, 4
          %s149 = int_to_ptr.vmem [resolvable:$true] %s148
          %154 = dma.hbm_to_vmem [thread:$0]  %s147, 512, %s149, %s138, 128, 128, 8
        $region28: #{tpu_custom_call.1} parent=23 // pred_fallthru
          _
      $region24: #{tpu_custom_call.1} parent=5 // pred_fallthru
        _
      %p155 = scmp.le.s32.totalorder 1, %s15
      %p156 = scmp.lt.s32.totalorder %s15, 3
      %p157 = pnand %p155, %p156
      %p158 = pneg %p157
      // Predicated region
      $region29: #{tpu_custom_call.1} parent=5 // pred_check
        _
      $region30: #{tpu_custom_call.1} parent=5 // pred_check_branch
        %160 = sbr.rel (%p157) target = $region32
      $region31: #{tpu_custom_call.1} parent=5 // pred_region
        %s161 = ssub.s32 %s15, 1
        %s162 = sand.u32 %s28, 1
        %s163 = scalar_lea.sflag [#allocation3], %s162
        %s164 = sand.u32 %s28, 1
        %s165 = smul.addr %s164, 32
        %s166 = scalar_lea.vmem [#allocation2], %s165
        // Predicated region
        $region33: #{tpu_custom_call.1} parent=31 // pred_check
          %p167 = pneg %p41
        $region34: #{tpu_custom_call.1} parent=31 // pred_check_branch
          %169 = sbr.rel (%p167) target = $region36
        $region35: #{tpu_custom_call.1} parent=31 // pred_region
          %170 = dma.done %s163, 512
        $region36: #{tpu_custom_call.1} parent=31 // pred_fallthru
          _
        %s171 = sand.u32 %s28, 1
        %s172 = scalar_lea.sflag [#allocation3], %s171
        %s173 = sand.u32 %s28, 1
        %s174 = smul.addr %s173, 32
        %s175 = scalar_lea.vmem [#allocation2], %s174
        %p176 = pneg %p41
        %p177 = pneg %p38
        %p178 = pneg %p62
        %p179 = pneg %p59
        %p180 = pneg %p83
        %p181 = pneg %p80
        %p182 = pneg %p109
        %p183 = pneg %p106
        %s184 = sand.u32 %s96, 1
        %s185 = scalar_lea.sflag [#allocation4], %s184
        %s186 = sand.u32 %s96, 1
        %s187 = smul.addr %s186, 32
        %s188 = scalar_lea.vmem [#allocation5], %s187
        %v189 = vld [vmem:[%s166] sm:$0xff]
        %v190 = vld [vmem:[%s166 + $0x8] sm:$0xff]
        %v191 = vld [vmem:[%s166 + $0x10] sm:$0xff]
        %v192 = vld [vmem:[%s166 + $0x18] sm:$0xff]
        %v193 = vlaneseq
        %v194 = vand.u32 %v193, 127
        %vm195 = vcmp.gt.f32.partialorder %v189, 0.0
        %vm196 = vcmp.gt.f32.partialorder %v190, 0.0
        %vm197 = vcmp.gt.f32.partialorder %v191, 0.0
        %vm198 = vcmp.gt.f32.partialorder %v192, 0.0
        %v199 = vmul.f32 %v189, 0.2
        %v200 = vmul.f32 %v190, 0.2
        %v201 = vmul.f32 %v191, 0.2
        %v202 = vmul.f32 %v192, 0.2
        %v203 = vsel %vm195, %v189, %v199
        %v204 = vsel %vm196, %v190, %v200
        %v205 = vsel %vm197, %v191, %v201
        %v206 = vsel %vm198, %v192, %v202
        %207 = vrot.lane.b32.xlu0 %v203, 1
        %v208 = vpop.permute.xlu0 %207
        %209 = vrot.lane.b32.xlu0 %v204, 1
        %v210 = vpop.permute.xlu0 %209
        %211 = vrot.lane.b32.xlu0 %v205, 1
        %v212 = vpop.permute.xlu0 %211
        %213 = vrot.lane.b32.xlu0 %v206, 1
        %v214 = vpop.permute.xlu0 %213
        %v215 = vadd.s32 %v194, 4294967295
        %vm216 = vcmp.ge.s32.totalorder %v215, 0
        %vm217 = vcmp.lt.s32.totalorder %v215, 128
        %vm218 = vmand %vm216, %vm217
        %v219 = vsel %vm218, %v208, 0.0
        %v220 = vsel %vm218, %v210, 0.0
        %v221 = vsel %vm218, %v212, 0.0
        %v222 = vsel %vm218, %v214, 0.0
        %v223 = vld [vmem:[%s1] sm:$0xff]
        %v224 = vld [vmem:[%s1 + $0x8] sm:$0xff]
        %v225 = vld [vmem:[%s1 + $0x10] sm:$0xff]
        %v226 = vld [vmem:[%s1 + $0x18] sm:$0xff]
        %s227 = scalar_lea.vmem %s1, 32
        %v228 = vld [vmem:[%s227] sm:$0xff]
        %v229 = vld [vmem:[%s227 + $0x8] sm:$0xff]
        %v230 = vld [vmem:[%s227 + $0x10] sm:$0xff]
        %v231 = vld [vmem:[%s227 + $0x18] sm:$0xff]
        %vm232 = vcmask 261120
        %v234 = vsel %vm232, %v228, 0
        %v237 = vsel %vm232, %v229, 0
        %v240 = vsel %vm232, %v230, 0
        %v243 = vsel %vm232, %v231, 0
        %245 = vmatprep.subr.mxu0 0.0
        %246 = vmatpush1.msra.mxu0 %v203
        %247 = vmatprep.subr.mxu0 0.0
        %248 = vmatpush1.msra.mxu0 %v204
        %249 = vmatprep.subr.mxu0 0.0
        %250 = vmatpush1.msra.mxu0 %v205
        %251 = vmatprep.subr.mxu0 0.0
        %252 = vmatpush1.msra.mxu0 %v206
        %253 = vmatprep.subr.mxu0 0.0
        %254 = vmatpush1.msra.mxu0 0.0
        %255 = vmatprep.subr.mxu0 0.0
        %256 = vmatpush1.msra.mxu0 0.0
        %257 = vmatprep.subr.mxu0 0.0
        %258 = vmatpush1.msra.mxu0 0.0
        %259 = vmatprep.subr.mxu0 0.0
        %260 = vmatpush1.msra.mxu0 0.0
        %261 = vmatprep.subr.mxu0 0.0
        %262 = vmatpush1.msra.mxu0 0.0
        %263 = vmatprep.subr.mxu0 0.0
        %264 = vmatpush1.msra.mxu0 0.0
        %265 = vmatprep.subr.mxu0 0.0
        %266 = vmatpush1.msra.mxu0 0.0
        %267 = vmatprep.subr.mxu0 0.0
        %268 = vmatpush1.msra.mxu0 0.0
        %269 = vmatprep.subr.mxu0 0.0
        %270 = vmatpush1.msra.mxu0 0.0
        %271 = vmatprep.subr.mxu0 0.0
        %272 = vmatpush1.msra.mxu0 0.0
        %273 = vmatprep.subr.mxu0 0.0
        %274 = vmatpush1.msra.mxu0 0.0
        %275 = vmatprep.subr.mxu0 0.0
        %276 = vmatpush1.msra.mxu0 0.0
        %277 = vmatprep.subr.mxu0 0.0
        %278 = vmatpush1.msra.mxu0 0.0
        %279 = vmatprep.subr.mxu0 0.0
        %280 = vmatpush1.msra.mxu0 0.0
        %281 = vmatprep.subr.mxu0 0.0
        %282 = vmatpush1.msra.mxu0 0.0
        %283 = vmatprep.subr.mxu0 0.0
        %284 = vmatpush1.msra.mxu0 0.0
        %285 = vmatprep.subr.mxu0 0.0
        %286 = vmatpush1.msra.mxu0 0.0
        %287 = vmatprep.subr.mxu0 0.0
        %288 = vmatpush1.msra.mxu0 0.0
        %289 = vmatprep.subr.mxu0 0.0
        %290 = vmatpush1.msra.mxu0 0.0
        %291 = vmatprep.subr.mxu0 0.0
        %292 = vmatpush1.msra.mxu0 0.0
        %293 = vmatprep.subr.mxu0 0.0
        %294 = vmatpush1.msra.mxu0 0.0
        %295 = vmatprep.subr.mxu0 0.0
        %296 = vmatpush1.msra.mxu0 0.0
        %297 = vmatprep.subr.mxu0 0.0
        %298 = vmatpush1.msra.mxu0 0.0
        %299 = vmatprep.subr.mxu0 0.0
        %300 = vmatpush1.msra.mxu0 0.0
        %301 = vmatprep.subr.mxu0 0.0
        %302 = vmatpush1.msra.mxu0 0.0
        %303 = vmatprep.subr.mxu0 0.0
        %304 = vmatpush1.msra.mxu0 0.0
        %305 = vmatprep.subr.mxu0 0.0
        %306 = vmatpush1.msra.mxu0 0.0
        %307 = vmatprep.subr.mxu0 0.0
        %308 = vmatpush1.msra.mxu0 0.0
        %309 = vmatprep.mubr.f32.mxu0 0.0
        %310 = vmatmul.mubr.f32.gmra.mrb[0].mxu0 %v234
        %v311 = vpop.f32.mrb[0].mxu0
        %v312 = vadd.f32 0.0, %v311
        %v313 = vpop.f32.mrb[0].mxu0
        %314 = vmatprep.mubr.f32.mxu0 0.0
        %315 = vmatmul.mubr.f32.gmra.mrb[0].mxu0 %v237
        %v316 = vpop.f32.mrb[0].mxu0
        %v317 = vadd.f32 0.0, %v316
        %v318 = vpop.f32.mrb[0].mxu0
        %319 = vmatprep.mubr.f32.mxu0 0.0
        %320 = vmatmul.mubr.f32.gmra.mrb[0].mxu0 %v240
        %v321 = vpop.f32.mrb[0].mxu0
        %v322 = vadd.f32 0.0, %v321
        %v323 = vpop.f32.mrb[0].mxu0
        %324 = vmatprep.mubr.f32.mxu0 0.0
        %325 = vmatmul.mubr.f32.gmra.mrb[0].mxu0 %v243
        %v326 = vpop.f32.mrb[0].mxu0
        %v327 = vadd.f32 0.0, %v326
        %v328 = vpop.f32.mrb[0].mxu0
        %329 = vdwg.mxu0
        %v331 = vsel %vm232, %v223, 0
        %v334 = vsel %vm232, %v224, 0
        %v337 = vsel %vm232, %v225, 0
        %v340 = vsel %vm232, %v226, 0
        %342 = vmatprep.subr.mxu0 0.0
        %343 = vmatpush1.msra.mxu0 %v219
        %344 = vmatprep.subr.mxu0 0.0
        %345 = vmatpush1.msra.mxu0 %v220
        %346 = vmatprep.subr.mxu0 0.0
        %347 = vmatpush1.msra.mxu0 %v221
        %348 = vmatprep.subr.mxu0 0.0
        %349 = vmatpush1.msra.mxu0 %v222
        %350 = vmatprep.subr.mxu0 0.0
        %351 = vmatpush1.msra.mxu0 0.0
        %352 = vmatprep.subr.mxu0 0.0
        %353 = vmatpush1.msra.mxu0 0.0
        %354 = vmatprep.subr.mxu0 0.0
        %355 = vmatpush1.msra.mxu0 0.0
        %356 = vmatprep.subr.mxu0 0.0
        %357 = vmatpush1.msra.mxu0 0.0
        %358 = vmatprep.subr.mxu0 0.0
        %359 = vmatpush1.msra.mxu0 0.0
        %360 = vmatprep.subr.mxu0 0.0
        %361 = vmatpush1.msra.mxu0 0.0
        %362 = vmatprep.subr.mxu0 0.0
        %363 = vmatpush1.msra.mxu0 0.0
        %364 = vmatprep.subr.mxu0 0.0
        %365 = vmatpush1.msra.mxu0 0.0
        %366 = vmatprep.subr.mxu0 0.0
        %367 = vmatpush1.msra.mxu0 0.0
        %368 = vmatprep.subr.mxu0 0.0
        %369 = vmatpush1.msra.mxu0 0.0
        %370 = vmatprep.subr.mxu0 0.0
        %371 = vmatpush1.msra.mxu0 0.0
        %372 = vmatprep.subr.mxu0 0.0
        %373 = vmatpush1.msra.mxu0 0.0
        %374 = vmatprep.subr.mxu0 0.0
        %375 = vmatpush1.msra.mxu0 0.0
        %376 = vmatprep.subr.mxu0 0.0
        %377 = vmatpush1.msra.mxu0 0.0
        %378 = vmatprep.subr.mxu0 0.0
        %379 = vmatpush1.msra.mxu0 0.0
        %380 = vmatprep.subr.mxu0 0.0
        %381 = vmatpush1.msra.mxu0 0.0
        %382 = vmatprep.subr.mxu0 0.0
        %383 = vmatpush1.msra.mxu0 0.0
        %384 = vmatprep.subr.mxu0 0.0
        %385 = vmatpush1.msra.mxu0 0.0
        %386 = vmatprep.subr.mxu0 0.0
        %387 = vmatpush1.msra.mxu0 0.0
        %388 = vmatprep.subr.mxu0 0.0
        %389 = vmatpush1.msra.mxu0 0.0
        %390 = vmatprep.subr.mxu0 0.0
        %391 = vmatpush1.msra.mxu0 0.0
        %392 = vmatprep.subr.mxu0 0.0
        %393 = vmatpush1.msra.mxu0 0.0
        %394 = vmatprep.subr.mxu0 0.0
        %395 = vmatpush1.msra.mxu0 0.0
        %396 = vmatprep.subr.mxu0 0.0
        %397 = vmatpush1.msra.mxu0 0.0
        %398 = vmatprep.subr.mxu0 0.0
        %399 = vmatpush1.msra.mxu0 0.0
        %400 = vmatprep.subr.mxu0 0.0
        %401 = vmatpush1.msra.mxu0 0.0
        %402 = vmatprep.subr.mxu0 0.0
        %403 = vmatpush1.msra.mxu0 0.0
        %404 = vmatprep.subr.mxu0 0.0
        %405 = vmatpush1.msra.mxu0 0.0
        %406 = vmatprep.mubr.f32.mxu0 0.0
        %407 = vmatmul.mubr.f32.gmra.mrb[0].mxu0 %v331
        %v408 = vpop.f32.mrb[0].mxu0
        %v409 = vadd.f32 %v312, %v408
        %v410 = vpop.f32.mrb[0].mxu0
        %411 = vmatprep.mubr.f32.mxu0 0.0
        %412 = vmatmul.mubr.f32.gmra.mrb[0].mxu0 %v334
        %v413 = vpop.f32.mrb[0].mxu0
        %v414 = vadd.f32 %v317, %v413
        %v415 = vpop.f32.mrb[0].mxu0
        %416 = vmatprep.mubr.f32.mxu0 0.0
        %417 = vmatmul.mubr.f32.gmra.mrb[0].mxu0 %v337
        %v418 = vpop.f32.mrb[0].mxu0
        %v419 = vadd.f32 %v322, %v418
        %v420 = vpop.f32.mrb[0].mxu0
        %421 = vmatprep.mubr.f32.mxu0 0.0
        %422 = vmatmul.mubr.f32.gmra.mrb[0].mxu0 %v340
        %v423 = vpop.f32.mrb[0].mxu0
        %v424 = vadd.f32 %v327, %v423
        %v425 = vpop.f32.mrb[0].mxu0
        %426 = vdwg.mxu0
        %427 = vrot.lane.b32.xlu0 %v203, 127
        %v428 = vpop.permute.xlu0 %427
        %429 = vrot.lane.b32.xlu0 %v204, 127
        %v430 = vpop.permute.xlu0 %429
        %431 = vrot.lane.b32.xlu0 %v205, 127
        %v432 = vpop.permute.xlu0 %431
        %433 = vrot.lane.b32.xlu0 %v206, 127
        %v434 = vpop.permute.xlu0 %433
        %v435 = vadd.s32 %v194, 1
        %vm436 = vcmp.ge.s32.totalorder %v435, 0
        %vm437 = vcmp.lt.s32.totalorder %v435, 128
        %vm438 = vmand %vm436, %vm437
        %v439 = vsel %vm438, %v428, 0.0
        %v440 = vsel %vm438, %v430, 0.0
        %v441 = vsel %vm438, %v432, 0.0
        %v442 = vsel %vm438, %v434, 0.0
        %s443 = scalar_lea.vmem %s1, 64
        %v444 = vld [vmem:[%s443] sm:$0xff]
        %v445 = vld [vmem:[%s443 + $0x8] sm:$0xff]
        %v446 = vld [vmem:[%s443 + $0x10] sm:$0xff]
        %v447 = vld [vmem:[%s443 + $0x18] sm:$0xff]
        %v449 = vsel %vm232, %v444, 0
        %v452 = vsel %vm232, %v445, 0
        %v455 = vsel %vm232, %v446, 0
        %v458 = vsel %vm232, %v447, 0
        %460 = vmatprep.subr.mxu0 0.0
        %461 = vmatpush1.msra.mxu0 %v439
        %462 = vmatprep.subr.mxu0 0.0
        %463 = vmatpush1.msra.mxu0 %v440
        %464 = vmatprep.subr.mxu0 0.0
        %465 = vmatpush1.msra.mxu0 %v441
        %466 = vmatprep.subr.mxu0 0.0
        %467 = vmatpush1.msra.mxu0 %v442
        %468 = vmatprep.subr.mxu0 0.0
        %469 = vmatpush1.msra.mxu0 0.0
        %470 = vmatprep.subr.mxu0 0.0
        %471 = vmatpush1.msra.mxu0 0.0
        %472 = vmatprep.subr.mxu0 0.0
        %473 = vmatpush1.msra.mxu0 0.0
        %474 = vmatprep.subr.mxu0 0.0
        %475 = vmatpush1.msra.mxu0 0.0
        %476 = vmatprep.subr.mxu0 0.0
        %477 = vmatpush1.msra.mxu0 0.0
        %478 = vmatprep.subr.mxu0 0.0
        %479 = vmatpush1.msra.mxu0 0.0
        %480 = vmatprep.subr.mxu0 0.0
        %481 = vmatpush1.msra.mxu0 0.0
        %482 = vmatprep.subr.mxu0 0.0
        %483 = vmatpush1.msra.mxu0 0.0
        %484 = vmatprep.subr.mxu0 0.0
        %485 = vmatpush1.msra.mxu0 0.0
        %486 = vmatprep.subr.mxu0 0.0
        %487 = vmatpush1.msra.mxu0 0.0
        %488 = vmatprep.subr.mxu0 0.0
        %489 = vmatpush1.msra.mxu0 0.0
        %490 = vmatprep.subr.mxu0 0.0
        %491 = vmatpush1.msra.mxu0 0.0
        %492 = vmatprep.subr.mxu0 0.0
        %493 = vmatpush1.msra.mxu0 0.0
        %494 = vmatprep.subr.mxu0 0.0
        %495 = vmatpush1.msra.mxu0 0.0
        %496 = vmatprep.subr.mxu0 0.0
        %497 = vmatpush1.msra.mxu0 0.0
        %498 = vmatprep.subr.mxu0 0.0
        %499 = vmatpush1.msra.mxu0 0.0
        %500 = vmatprep.subr.mxu0 0.0
        %501 = vmatpush1.msra.mxu0 0.0
        %502 = vmatprep.subr.mxu0 0.0
        %503 = vmatpush1.msra.mxu0 0.0
        %504 = vmatprep.subr.mxu0 0.0
        %505 = vmatpush1.msra.mxu0 0.0
        %506 = vmatprep.subr.mxu0 0.0
        %507 = vmatpush1.msra.mxu0 0.0
        %508 = vmatprep.subr.mxu0 0.0
        %509 = vmatpush1.msra.mxu0 0.0
        %510 = vmatprep.subr.mxu0 0.0
        %511 = vmatpush1.msra.mxu0 0.0
        %512 = vmatprep.subr.mxu0 0.0
        %513 = vmatpush1.msra.mxu0 0.0
        %514 = vmatprep.subr.mxu0 0.0
        %515 = vmatpush1.msra.mxu0 0.0
        %516 = vmatprep.subr.mxu0 0.0
        %517 = vmatpush1.msra.mxu0 0.0
        %518 = vmatprep.subr.mxu0 0.0
        %519 = vmatpush1.msra.mxu0 0.0
        %520 = vmatprep.subr.mxu0 0.0
        %521 = vmatpush1.msra.mxu0 0.0
        %522 = vmatprep.subr.mxu0 0.0
        %523 = vmatpush1.msra.mxu0 0.0
        %524 = vmatprep.mubr.f32.mxu0 0.0
        %525 = vmatmul.mubr.f32.gmra.mrb[0].mxu0 %v449
        %v526 = vpop.f32.mrb[0].mxu0
        %v527 = vadd.f32 0.0, %v526
        %v528 = vpop.f32.mrb[0].mxu0
        %529 = vmatprep.mubr.f32.mxu0 0.0
        %530 = vmatmul.mubr.f32.gmra.mrb[0].mxu0 %v452
        %v531 = vpop.f32.mrb[0].mxu0
        %v532 = vadd.f32 0.0, %v531
        %v533 = vpop.f32.mrb[0].mxu0
        %534 = vmatprep.mubr.f32.mxu0 0.0
        %535 = vmatmul.mubr.f32.gmra.mrb[0].mxu0 %v455
        %v536 = vpop.f32.mrb[0].mxu0
        %v537 = vadd.f32 0.0, %v536
        %v538 = vpop.f32.mrb[0].mxu0
        %539 = vmatprep.mubr.f32.mxu0 0.0
        %540 = vmatmul.mubr.f32.gmra.mrb[0].mxu0 %v458
        %v541 = vpop.f32.mrb[0].mxu0
        %v542 = vadd.f32 0.0, %v541
        %v543 = vpop.f32.mrb[0].mxu0
        %544 = vdwg.mxu0
        %v545 = vadd.f32 %v409, %v527
        %v546 = vadd.f32 %v414, %v532
        %v547 = vadd.f32 %v419, %v537
        %v548 = vadd.f32 %v424, %v542
        %v549 = vld [vmem:[%s2] sm:$0xff]
        %v550 = vld [vmem:[%s2 + $0x8] sm:$0xff]
        %v551 = vld [vmem:[%s2 + $0x10] sm:$0xff]
        %v552 = vld [vmem:[%s2 + $0x18] sm:$0xff]
        %554 = vset.pattern.permute.xlu0 0
        %555 = vperm.xlu0 %554, %v549
        %v556 = vpop.permute.xlu0 %555
        %559 = vset.pattern.permute.xlu0 0
        %560 = vperm.xlu0 %559, %v550
        %v561 = vpop.permute.xlu0 %560
        %564 = vset.pattern.permute.xlu0 0
        %565 = vperm.xlu0 %564, %v551
        %v566 = vpop.permute.xlu0 %565
        %569 = vset.pattern.permute.xlu0 0
        %570 = vperm.xlu0 %569, %v552
        %v571 = vpop.permute.xlu0 %570
        %v573 = vadd.f32 %v545, %v556
        %v574 = vadd.f32 %v546, %v561
        %v575 = vadd.f32 %v547, %v566
        %v576 = vadd.f32 %v548, %v571
        %vm577 = vcmp.gt.f32.partialorder %v573, 0.0
        %vm578 = vcmp.gt.f32.partialorder %v574, 0.0
        %vm579 = vcmp.gt.f32.partialorder %v575, 0.0
        %vm580 = vcmp.gt.f32.partialorder %v576, 0.0
        %v581 = vmul.f32 %v573, 0.2
        %v582 = vmul.f32 %v574, 0.2
        %v583 = vmul.f32 %v575, 0.2
        %v584 = vmul.f32 %v576, 0.2
        %v585 = vsel %vm577, %v573, %v581
        %v586 = vsel %vm578, %v574, %v582
        %v587 = vsel %vm579, %v575, %v583
        %v588 = vsel %vm580, %v576, %v584
        %589 = vrot.lane.b32.xlu0 %v585, 3
        %v590 = vpop.permute.xlu0 %589
        %591 = vrot.lane.b32.xlu0 %v586, 3
        %v592 = vpop.permute.xlu0 %591
        %593 = vrot.lane.b32.xlu0 %v587, 3
        %v594 = vpop.permute.xlu0 %593
        %595 = vrot.lane.b32.xlu0 %v588, 3
        %v596 = vpop.permute.xlu0 %595
        %v597 = vadd.s32 %v194, 4294967293
        %vm598 = vcmp.ge.s32.totalorder %v597, 0
        %vm599 = vcmp.lt.s32.totalorder %v597, 128
        %vm600 = vmand %vm598, %vm599
        %v601 = vsel %vm600, %v590, 0.0
        %v602 = vsel %vm600, %v592, 0.0
        %v603 = vsel %vm600, %v594, 0.0
        %v604 = vsel %vm600, %v596, 0.0
        %s605 = scalar_lea.vmem %s1, 96
        %v606 = vld [vmem:[%s605] sm:$0xff]
        %v607 = vld [vmem:[%s605 + $0x8] sm:$0xff]
        %v608 = vld [vmem:[%s605 + $0x10] sm:$0xff]
        %v609 = vld [vmem:[%s605 + $0x18] sm:$0xff]
        %s610 = scalar_lea.vmem %s1, 128
        %v611 = vld [vmem:[%s610] sm:$0xff]
        %v612 = vld [vmem:[%s610 + $0x8] sm:$0xff]
        %v613 = vld [vmem:[%s610 + $0x10] sm:$0xff]
        %v614 = vld [vmem:[%s610 + $0x18] sm:$0xff]
        %v616 = vsel %vm232, %v611, 0
        %v619 = vsel %vm232, %v612, 0
        %v622 = vsel %vm232, %v613, 0
        %v625 = vsel %vm232, %v614, 0
        %627 = vmatprep.subr.mxu0 0.0
        %628 = vmatpush1.msra.mxu0 %v585
        %629 = vmatprep.subr.mxu0 0.0
        %630 = vmatpush1.msra.mxu0 %v586
        %631 = vmatprep.subr.mxu0 0.0
        %632 = vmatpush1.msra.mxu0 %v587
        %633 = vmatprep.subr.mxu0 0.0
        %634 = vmatpush1.msra.mxu0 %v588
        %635 = vmatprep.subr.mxu0 0.0
        %636 = vmatpush1.msra.mxu0 0.0
        %637 = vmatprep.subr.mxu0 0.0
        %638 = vmatpush1.msra.mxu0 0.0
        %639 = vmatprep.subr.mxu0 0.0
        %640 = vmatpush1.msra.mxu0 0.0
        %641 = vmatprep.subr.mxu0 0.0
        %642 = vmatpush1.msra.mxu0 0.0
        %643 = vmatprep.subr.mxu0 0.0
        %644 = vmatpush1.msra.mxu0 0.0
        %645 = vmatprep.subr.mxu0 0.0
        %646 = vmatpush1.msra.mxu0 0.0
        %647 = vmatprep.subr.mxu0 0.0
        %648 = vmatpush1.msra.mxu0 0.0
        %649 = vmatprep.subr.mxu0 0.0
        %650 = vmatpush1.msra.mxu0 0.0
        %651 = vmatprep.subr.mxu0 0.0
        %652 = vmatpush1.msra.mxu0 0.0
        %653 = vmatprep.subr.mxu0 0.0
        %654 = vmatpush1.msra.mxu0 0.0
        %655 = vmatprep.subr.mxu0 0.0
        %656 = vmatpush1.msra.mxu0 0.0
        %657 = vmatprep.subr.mxu0 0.0
        %658 = vmatpush1.msra.mxu0 0.0
        %659 = vmatprep.subr.mxu0 0.0
        %660 = vmatpush1.msra.mxu0 0.0
        %661 = vmatprep.subr.mxu0 0.0
        %662 = vmatpush1.msra.mxu0 0.0
        %663 = vmatprep.subr.mxu0 0.0
        %664 = vmatpush1.msra.mxu0 0.0
        %665 = vmatprep.subr.mxu0 0.0
        %666 = vmatpush1.msra.mxu0 0.0
        %667 = vmatprep.subr.mxu0 0.0
        %668 = vmatpush1.msra.mxu0 0.0
        %669 = vmatprep.subr.mxu0 0.0
        %670 = vmatpush1.msra.mxu0 0.0
        %671 = vmatprep.subr.mxu0 0.0
        %672 = vmatpush1.msra.mxu0 0.0
        %673 = vmatprep.subr.mxu0 0.0
        %674 = vmatpush1.msra.mxu0 0.0
        %675 = vmatprep.subr.mxu0 0.0
        %676 = vmatpush1.msra.mxu0 0.0
        %677 = vmatprep.subr.mxu0 0.0
        %678 = vmatpush1.msra.mxu0 0.0
        %679 = vmatprep.subr.mxu0 0.0
        %680 = vmatpush1.msra.mxu0 0.0
        %681 = vmatprep.subr.mxu0 0.0
        %682 = vmatpush1.msra.mxu0 0.0
        %683 = vmatprep.subr.mxu0 0.0
        %684 = vmatpush1.msra.mxu0 0.0
        %685 = vmatprep.subr.mxu0 0.0
        %686 = vmatpush1.msra.mxu0 0.0
        %687 = vmatprep.subr.mxu0 0.0
        %688 = vmatpush1.msra.mxu0 0.0
        %689 = vmatprep.subr.mxu0 0.0
        %690 = vmatpush1.msra.mxu0 0.0
        %691 = vmatprep.mubr.f32.mxu0 0.0
        %692 = vmatmul.mubr.f32.gmra.mrb[0].mxu0 %v616
        %v693 = vpop.f32.mrb[0].mxu0
        %v694 = vadd.f32 0.0, %v693
        %v695 = vpop.f32.mrb[0].mxu0
        %696 = vmatprep.mubr.f32.mxu0 0.0
        %697 = vmatmul.mubr.f32.gmra.mrb[0].mxu0 %v619
        %v698 = vpop.f32.mrb[0].mxu0
        %v699 = vadd.f32 0.0, %v698
        %v700 = vpop.f32.mrb[0].mxu0
        %701 = vmatprep.mubr.f32.mxu0 0.0
        %702 = vmatmul.mubr.f32.gmra.mrb[0].mxu0 %v622
        %v703 = vpop.f32.mrb[0].mxu0
        %v704 = vadd.f32 0.0, %v703
        %v705 = vpop.f32.mrb[0].mxu0
        %706 = vmatprep.mubr.f32.mxu0 0.0
        %707 = vmatmul.mubr.f32.gmra.mrb[0].mxu0 %v625
        %v708 = vpop.f32.mrb[0].mxu0
        %v709 = vadd.f32 0.0, %v708
        %v710 = vpop.f32.mrb[0].mxu0
        %711 = vdwg.mxu0
        %v713 = vsel %vm232, %v606, 0
        %v716 = vsel %vm232, %v607, 0
        %v719 = vsel %vm232, %v608, 0
        %v722 = vsel %vm232, %v609, 0
        %724 = vmatprep.subr.mxu0 0.0
        %725 = vmatpush1.msra.mxu0 %v601
        %726 = vmatprep.subr.mxu0 0.0
        %727 = vmatpush1.msra.mxu0 %v602
        %728 = vmatprep.subr.mxu0 0.0
        %729 = vmatpush1.msra.mxu0 %v603
        %730 = vmatprep.subr.mxu0 0.0
        %731 = vmatpush1.msra.mxu0 %v604
        %732 = vmatprep.subr.mxu0 0.0
        %733 = vmatpush1.msra.mxu0 0.0
        %734 = vmatprep.subr.mxu0 0.0
        %735 = vmatpush1.msra.mxu0 0.0
        %736 = vmatprep.subr.mxu0 0.0
        %737 = vmatpush1.msra.mxu0 0.0
        %738 = vmatprep.subr.mxu0 0.0
        %739 = vmatpush1.msra.mxu0 0.0
        %740 = vmatprep.subr.mxu0 0.0
        %741 = vmatpush1.msra.mxu0 0.0
        %742 = vmatprep.subr.mxu0 0.0
        %743 = vmatpush1.msra.mxu0 0.0
        %744 = vmatprep.subr.mxu0 0.0
        %745 = vmatpush1.msra.mxu0 0.0
        %746 = vmatprep.subr.mxu0 0.0
        %747 = vmatpush1.msra.mxu0 0.0
        %748 = vmatprep.subr.mxu0 0.0
        %749 = vmatpush1.msra.mxu0 0.0
        %750 = vmatprep.subr.mxu0 0.0
        %751 = vmatpush1.msra.mxu0 0.0
        %752 = vmatprep.subr.mxu0 0.0
        %753 = vmatpush1.msra.mxu0 0.0
        %754 = vmatprep.subr.mxu0 0.0
        %755 = vmatpush1.msra.mxu0 0.0
        %756 = vmatprep.subr.mxu0 0.0
        %757 = vmatpush1.msra.mxu0 0.0
        %758 = vmatprep.subr.mxu0 0.0
        %759 = vmatpush1.msra.mxu0 0.0
        %760 = vmatprep.subr.mxu0 0.0
        %761 = vmatpush1.msra.mxu0 0.0
        %762 = vmatprep.subr.mxu0 0.0
        %763 = vmatpush1.msra.mxu0 0.0
        %764 = vmatprep.subr.mxu0 0.0
        %765 = vmatpush1.msra.mxu0 0.0
        %766 = vmatprep.subr.mxu0 0.0
        %767 = vmatpush1.msra.mxu0 0.0
        %768 = vmatprep.subr.mxu0 0.0
        %769 = vmatpush1.msra.mxu0 0.0
        %770 = vmatprep.subr.mxu0 0.0
        %771 = vmatpush1.msra.mxu0 0.0
        %772 = vmatprep.subr.mxu0 0.0
        %773 = vmatpush1.msra.mxu0 0.0
        %774 = vmatprep.subr.mxu0 0.0
        %775 = vmatpush1.msra.mxu0 0.0
        %776 = vmatprep.subr.mxu0 0.0
        %777 = vmatpush1.msra.mxu0 0.0
        %778 = vmatprep.subr.mxu0 0.0
        %779 = vmatpush1.msra.mxu0 0.0
        %780 = vmatprep.subr.mxu0 0.0
        %781 = vmatpush1.msra.mxu0 0.0
        %782 = vmatprep.subr.mxu0 0.0
        %783 = vmatpush1.msra.mxu0 0.0
        %784 = vmatprep.subr.mxu0 0.0
        %785 = vmatpush1.msra.mxu0 0.0
        %786 = vmatprep.subr.mxu0 0.0
        %787 = vmatpush1.msra.mxu0 0.0
        %788 = vmatprep.mubr.f32.mxu0 0.0
        %789 = vmatmul.mubr.f32.gmra.mrb[0].mxu0 %v713
        %v790 = vpop.f32.mrb[0].mxu0
        %v791 = vadd.f32 %v694, %v790
        %v792 = vpop.f32.mrb[0].mxu0
        %793 = vmatprep.mubr.f32.mxu0 0.0
        %794 = vmatmul.mubr.f32.gmra.mrb[0].mxu0 %v716
        %v795 = vpop.f32.mrb[0].mxu0
        %v796 = vadd.f32 %v699, %v795
        %v797 = vpop.f32.mrb[0].mxu0
        %798 = vmatprep.mubr.f32.mxu0 0.0
        %799 = vmatmul.mubr.f32.gmra.mrb[0].mxu0 %v719
        %v800 = vpop.f32.mrb[0].mxu0
        %v801 = vadd.f32 %v704, %v800
        %v802 = vpop.f32.mrb[0].mxu0
        %803 = vmatprep.mubr.f32.mxu0 0.0
        %804 = vmatmul.mubr.f32.gmra.mrb[0].mxu0 %v722
        %v805 = vpop.f32.mrb[0].mxu0
        %v806 = vadd.f32 %v709, %v805
        %v807 = vpop.f32.mrb[0].mxu0
        %808 = vdwg.mxu0
        %809 = vrot.lane.b32.xlu0 %v585, 125
        %v810 = vpop.permute.xlu0 %809
        %811 = vrot.lane.b32.xlu0 %v586, 125
        %v812 = vpop.permute.xlu0 %811
        %813 = vrot.lane.b32.xlu0 %v587, 125
        %v814 = vpop.permute.xlu0 %813
        %815 = vrot.lane.b32.xlu0 %v588, 125
        %v816 = vpop.permute.xlu0 %815
        %v817 = vadd.s32 %v194, 3
        %vm818 = vcmp.ge.s32.totalorder %v817, 0
        %vm819 = vcmp.lt.s32.totalorder %v817, 128
        %vm820 = vmand %vm818, %vm819
        %v821 = vsel %vm820, %v810, 0.0
        %v822 = vsel %vm820, %v812, 0.0
        %v823 = vsel %vm820, %v814, 0.0
        %v824 = vsel %vm820, %v816, 0.0
        %s825 = scalar_lea.vmem %s1, 160
        %v826 = vld [vmem:[%s825] sm:$0xff]
        %v827 = vld [vmem:[%s825 + $0x8] sm:$0xff]
        %v828 = vld [vmem:[%s825 + $0x10] sm:$0xff]
        %v829 = vld [vmem:[%s825 + $0x18] sm:$0xff]
        %v831 = vsel %vm232, %v826, 0
        %v834 = vsel %vm232, %v827, 0
        %v837 = vsel %vm232, %v828, 0
        %v840 = vsel %vm232, %v829, 0
        %842 = vmatprep.subr.mxu0 0.0
        %843 = vmatpush1.msra.mxu0 %v821
        %844 = vmatprep.subr.mxu0 0.0
        %845 = vmatpush1.msra.mxu0 %v822
        %846 = vmatprep.subr.mxu0 0.0
        %847 = vmatpush1.msra.mxu0 %v823
        %848 = vmatprep.subr.mxu0 0.0
        %849 = vmatpush1.msra.mxu0 %v824
        %850 = vmatprep.subr.mxu0 0.0
        %851 = vmatpush1.msra.mxu0 0.0
        %852 = vmatprep.subr.mxu0 0.0
        %853 = vmatpush1.msra.mxu0 0.0
        %854 = vmatprep.subr.mxu0 0.0
        %855 = vmatpush1.msra.mxu0 0.0
        %856 = vmatprep.subr.mxu0 0.0
        %857 = vmatpush1.msra.mxu0 0.0
        %858 = vmatprep.subr.mxu0 0.0
        %859 = vmatpush1.msra.mxu0 0.0
        %860 = vmatprep.subr.mxu0 0.0
        %861 = vmatpush1.msra.mxu0 0.0
        %862 = vmatprep.subr.mxu0 0.0
        %863 = vmatpush1.msra.mxu0 0.0
        %864 = vmatprep.subr.mxu0 0.0
        %865 = vmatpush1.msra.mxu0 0.0
        %866 = vmatprep.subr.mxu0 0.0
        %867 = vmatpush1.msra.mxu0 0.0
        %868 = vmatprep.subr.mxu0 0.0
        %869 = vmatpush1.msra.mxu0 0.0
        %870 = vmatprep.subr.mxu0 0.0
        %871 = vmatpush1.msra.mxu0 0.0
        %872 = vmatprep.subr.mxu0 0.0
        %873 = vmatpush1.msra.mxu0 0.0
        %874 = vmatprep.subr.mxu0 0.0
        %875 = vmatpush1.msra.mxu0 0.0
        %876 = vmatprep.subr.mxu0 0.0
        %877 = vmatpush1.msra.mxu0 0.0
        %878 = vmatprep.subr.mxu0 0.0
        %879 = vmatpush1.msra.mxu0 0.0
        %880 = vmatprep.subr.mxu0 0.0
        %881 = vmatpush1.msra.mxu0 0.0
        %882 = vmatprep.subr.mxu0 0.0
        %883 = vmatpush1.msra.mxu0 0.0
        %884 = vmatprep.subr.mxu0 0.0
        %885 = vmatpush1.msra.mxu0 0.0
        %886 = vmatprep.subr.mxu0 0.0
        %887 = vmatpush1.msra.mxu0 0.0
        %888 = vmatprep.subr.mxu0 0.0
        %889 = vmatpush1.msra.mxu0 0.0
        %890 = vmatprep.subr.mxu0 0.0
        %891 = vmatpush1.msra.mxu0 0.0
        %892 = vmatprep.subr.mxu0 0.0
        %893 = vmatpush1.msra.mxu0 0.0
        %894 = vmatprep.subr.mxu0 0.0
        %895 = vmatpush1.msra.mxu0 0.0
        %896 = vmatprep.subr.mxu0 0.0
        %897 = vmatpush1.msra.mxu0 0.0
        %898 = vmatprep.subr.mxu0 0.0
        %899 = vmatpush1.msra.mxu0 0.0
        %900 = vmatprep.subr.mxu0 0.0
        %901 = vmatpush1.msra.mxu0 0.0
        %902 = vmatprep.subr.mxu0 0.0
        %903 = vmatpush1.msra.mxu0 0.0
        %904 = vmatprep.subr.mxu0 0.0
        %905 = vmatpush1.msra.mxu0 0.0
        %906 = vmatprep.mubr.f32.mxu0 0.0
        %907 = vmatmul.mubr.f32.gmra.mrb[0].mxu0 %v831
        %v908 = vpop.f32.mrb[0].mxu0
        %v909 = vadd.f32 0.0, %v908
        %v910 = vpop.f32.mrb[0].mxu0
        %911 = vmatprep.mubr.f32.mxu0 0.0
        %912 = vmatmul.mubr.f32.gmra.mrb[0].mxu0 %v834
        %v913 = vpop.f32.mrb[0].mxu0
        %v914 = vadd.f32 0.0, %v913
        %v915 = vpop.f32.mrb[0].mxu0
        %916 = vmatprep.mubr.f32.mxu0 0.0
        %917 = vmatmul.mubr.f32.gmra.mrb[0].mxu0 %v837
        %v918 = vpop.f32.mrb[0].mxu0
        %v919 = vadd.f32 0.0, %v918
        %v920 = vpop.f32.mrb[0].mxu0
        %921 = vmatprep.mubr.f32.mxu0 0.0
        %922 = vmatmul.mubr.f32.gmra.mrb[0].mxu0 %v840
        %v923 = vpop.f32.mrb[0].mxu0
        %v924 = vadd.f32 0.0, %v923
        %v925 = vpop.f32.mrb[0].mxu0
        %926 = vdwg.mxu0
        %v927 = vadd.f32 %v791, %v909
        %v928 = vadd.f32 %v796, %v914
        %v929 = vadd.f32 %v801, %v919
        %v930 = vadd.f32 %v806, %v924
        %s931 = scalar_lea.vmem %s2, 32
        %v932 = vld [vmem:[%s931] sm:$0xff]
        %v933 = vld [vmem:[%s931 + $0x8] sm:$0xff]
        %v934 = vld [vmem:[%s931 + $0x10] sm:$0xff]
        %v935 = vld [vmem:[%s931 + $0x18] sm:$0xff]
        %937 = vset.pattern.permute.xlu0 0
        %938 = vperm.xlu0 %937, %v932
        %v939 = vpop.permute.xlu0 %938
        %942 = vset.pattern.permute.xlu0 0
        %943 = vperm.xlu0 %942, %v933
        %v944 = vpop.permute.xlu0 %943
        %947 = vset.pattern.permute.xlu0 0
        %948 = vperm.xlu0 %947, %v934
        %v949 = vpop.permute.xlu0 %948
        %952 = vset.pattern.permute.xlu0 0
        %953 = vperm.xlu0 %952, %v935
        %v954 = vpop.permute.xlu0 %953
        %v956 = vadd.f32 %v927, %v939
        %v957 = vadd.f32 %v928, %v944
        %v958 = vadd.f32 %v929, %v949
        %v959 = vadd.f32 %v930, %v954
        %v960 = vadd.f32 %v956, %v189
        %v961 = vadd.f32 %v957, %v190
        %v962 = vadd.f32 %v958, %v191
        %v963 = vadd.f32 %v959, %v192
        %964 = vst [vmem:[%s188] sm:$0xff] %v960
        %965 = vst [vmem:[%s188 + $0x8] sm:$0xff] %v961
        %966 = vst [vmem:[%s188 + $0x10] sm:$0xff] %v962
        %967 = vst [vmem:[%s188 + $0x18] sm:$0xff] %v963
        %s968 = sand.u32 %s96, 1
        %s969 = scalar_lea.sflag [#allocation4], %s968
        %s970 = sand.u32 %s96, 1
        %s971 = smul.addr %s970, 32
        %s972 = scalar_lea.vmem [#allocation5], %s971
        // Predicated region
        $region37: #{tpu_custom_call.1} parent=31 // pred_check
          %p973 = pneg %p106
        $region38: #{tpu_custom_call.1} parent=31 // pred_check_branch
          %975 = sbr.rel (%p973) target = $region40
        $region39: #{tpu_custom_call.1} parent=31 // pred_region
          %s977 = ssub.s32 512, 512
          %978 = vsyncadd %s969, %s977
          %s979 = smul.addr %s20, 4
          %s980 = smul.addr %s979, 128
          %s981 = scalar_lea.hbm %s3, %s980
          %s982 = sshll.u32 %s972, 4
          %s983 = int_to_ptr.vmem [resolvable:$true] %s982
          %988 = dma.vmem_to_hbm [thread:$0]  %s983, 512, %s981, %s969, 128, 128, 8
        $region40: #{tpu_custom_call.1} parent=31 // pred_fallthru
          _
      $region32: #{tpu_custom_call.1} parent=5 // pred_fallthru
        _
      %p989 = scmp.le.s32.totalorder 2, %s15
      // Predicated region
      $region41: #{tpu_custom_call.1} parent=5 // pred_check
        %p990 = pneg %p989
      $region42: #{tpu_custom_call.1} parent=5 // pred_check_branch
        %992 = sbr.rel (%p990) target = $region44
      $region43: #{tpu_custom_call.1} parent=5 // pred_region
        %s993 = ssub.s32 %s15, 2
        // Predicated region
        $region45: #{tpu_custom_call.1} parent=43 // pred_check
          %p994 = pneg %p112
        $region46: #{tpu_custom_call.1} parent=43 // pred_check_branch
          %996 = sbr.rel (%p994) target = $region48
        $region47: #{tpu_custom_call.1} parent=43 // pred_region
          %s997 = sand.u32 %s97, 1
          %s998 = scalar_lea.sflag [#allocation4], %s997
          %s999 = sand.u32 %s97, 1
          %s1000 = smul.addr %s999, 32
          %s1001 = scalar_lea.vmem [#allocation5], %s1000
          %1002 = dma.done %s998, 512
        $region48: #{tpu_custom_call.1} parent=43 // pred_fallthru
          _
      $region44: #{tpu_custom_call.1} parent=5 // pred_fallthru
        _
    $region6: #{tpu_custom_call.1} parent=1 // loop_footer
      %s19 = sadd.s32 1, %s15
    $region7: #{tpu_custom_call.1} parent=1 // loop_footer_branch
      %14 = sbr.rel target = $region3
    $region8: #{tpu_custom_call.1} parent=1 // loop_exit
      _
    %1003 = vsyncpa [#allocation3], 1
    %s1004 = scalar_lea.sflag [#allocation3], 1
    %1005 = vsyncpa %s1004, 1
    %1006 = vsyncpa [#allocation4], 1
    %s1007 = scalar_lea.sflag [#allocation4], 1
    %1008 = vsyncpa %s1007, 1

</llo_original>
